<compile_context>
chip_gen: v6e
topology: v6e:2x2x1
jax: 0.10.0
libtpu: 0.0.40
codegen_flags: <defaults>
</compile_context>

<pallas_src>
import functools
from math import sqrt

import jax
import jax.numpy as jnp
from jax import lax
from jax.experimental import pallas as pl
from jax.experimental.pallas import tpu as pltpu


_ITER_RADIX_CROSSOVER = 32   # iterative mask-and-max for k <= 32, radix k-th-select above


def _attn_tile(q, kT, v, klen, amask, o_ref, *, topk, q_scale, exp_scale):
    f32 = jnp.float32

    # Temperature is folded into Q (TL,E) — S/E-fold fewer multiplies than scaling (TL,S).
    if q_scale != 1.0:
        q = (q * q_scale).astype(q.dtype)

    # QK^T on the MXU, f32 accumulation.  kT is pre-transposed: (E, S).
    qk = jnp.dot(q, kT, preferred_element_type=f32)            # (TL, S)
    if amask is not None:
        qk = qk + amask                                        # additive attn mask (TL, S)
    qk = qk + klen                                             # additive key-length (1, S)

    S = qk.shape[-1]
    row_max = jnp.max(qk, axis=-1, keepdims=True)              # reused as softmax max

    # exp (EUP) is independent of the top-k threshold search (VPU/XLU) — compute it first
    # so the scheduler can overlap the two.  Fully masked rows give NaN, same as reference.
    if exp_scale != 1.0:
        e = jnp.exp(f32(exp_scale) * (qk - row_max))           # (TL, S)
    else:
        e = jnp.exp(qk - row_max)

    if topk >= S:
        p = e                                                  # top-k is a no-op
    elif topk <= _ITER_RADIX_CROSSOVER:
        # Iterative mask-and-max threshold search: k-1 statically unrolled VPU/XLU passes.
        # TODO(synk): ties above rank k drop all tied entries at once, which can keep more
        #             than k values (prob-0 for continuous f32 scores; torch keeps exactly k).
        neg_inf = f32(-jnp.inf)
        work, thr = qk, row_max
        for _ in range(topk - 1):
            work = jnp.where(work >= thr, neg_inf, work)
            thr = jnp.max(work, axis=-1, keepdims=True)
        p = jnp.where(qk >= thr, e, f32(0.0))                  # keep fused into the exp
    else:
        # Exact k-th-largest per row, O(1) in k: 31 statically unrolled count passes of a
        # radix/bit binary search over an order-preserving int32 remap of the f32 scores.
        ibits = pltpu.bitcast(qk, jnp.int32)
        skey = jnp.where(ibits >= 0, ibits, ibits ^ jnp.int32(0x7FFFFFFF))  # (TL,S) int32
        n_ge0 = jnp.sum((skey >= 0).astype(jnp.int32), axis=-1, keepdims=True)
        thr_i = jnp.where(n_ge0 >= topk, jnp.int32(0), jnp.int32(-(2 ** 31)))
        for b in range(30, -1, -1):                            # static unroll: scheduler vis.
            cand = thr_i | jnp.int32(1 << b)
            cnt = jnp.sum((skey >= cand).astype(jnp.int32), axis=-1, keepdims=True)
            thr_i = jnp.where(cnt >= topk, cand, thr_i)
        p = jnp.where(skey >= thr_i, e, f32(0.0))              # keep fused into the exp

    denom = jnp.sum(p, axis=-1, keepdims=True)                 # (TL, 1)
    inv = pl.reciprocal(denom, approx=True)                    # EUP reciprocal
    inv = inv * (2.0 - denom * inv)                            # one Newton step -> ~exact
    # NOTE: nn.Dropout(0.1) is identity in eval mode; training-mode dropout not applied.
    out = jnp.dot(p.astype(v.dtype), v, preferred_element_type=f32)   # (TL, D), MXU
    o_ref[0, 0] = (out * inv).astype(o_ref.dtype)


def _exact_topk_kernel(q_ref, kT_ref, v_ref, klen_ref, o_ref, *, topk, q_scale, exp_scale):
    _attn_tile(q_ref[0, 0], kT_ref[0, 0], v_ref[0, 0], klen_ref[0], None, o_ref,
               topk=topk, q_scale=q_scale, exp_scale=exp_scale)


def _exact_topk_kernel_masked(q_ref, kT_ref, v_ref, amask_ref, klen_ref, o_ref, *,
                              topk, q_scale, exp_scale):
    _attn_tile(q_ref[0, 0], kT_ref[0, 0], v_ref[0, 0], klen_ref[0], amask_ref[...], o_ref,
               topk=topk, q_scale=q_scale, exp_scale=exp_scale)


def _vmem_capacity_bytes():
    """Generation-aware VMEM capacity; conservative (v7x) fallback if the query fails."""
    try:
        info = pltpu.get_tpu_info()
        cap = getattr(info, "vmem_capacity_bytes", None)
        if cap:
            return int(cap)
    except Exception:
        pass
    return 64 << 20


def _vmem_estimate(tl, S, E, D, qk_isz, v_isz, has_mask, nbuf_kv):
    """Per-grid-step VMEM need: pipelined blocks + live (tl,S) f32 intermediates."""
    per = 2 * tl * E * qk_isz                                   # Q block (double-buffered)
    per += nbuf_kv * (E * S * qk_isz + S * D * v_isz)           # resident K^T and V
    per += 2 * S * 4                                            # key-length additive
    per += 2 * tl * D * qk_isz                                  # output block
    if has_mask:
        per += 2 * tl * S * 4                                   # attention-mask block
    per += 5 * tl * S * 4                                       # qk, work/skey, p, scratch
    return per


def _choose_tiling(L, S, E, D, has_mask, qk_isz, v_isz, budget, max_l_tile):
    cands = []
    if L <= max_l_tile:
        cands.append(L)                                         # full L (exempt from 8-div)
    cands += [c for c in (512, 256, 128, 64, 32, 16, 8)
              if c < L and c <= max_l_tile and L % c == 0]
    if not cands:
        cands = [L]
    best2 = next((tl for tl in cands
                  if _vmem_estimate(tl, S, E, D, qk_isz, v_isz, has_mask, 2) <= budget), None)
    best1 = next((tl for tl in cands
                  if _vmem_estimate(tl, S, E, D, qk_isz, v_isz, has_mask, 1) <= budget), None)
    if best2 is not None and (best2 >= 128 or best1 is None or best1 <= best2):
        return best2, 2
    if best1 is not None:
        return best1, 1      # single-buffer resident K^T/V rather than shrinking TL further
    return cands[-1], 1


def exact_topk_attention(queries, keys, values, attn_additive=None, keylen_additive=None,
                         *, topk=32, softmax_temp=None, max_l_tile=256, pv_bf16=False):
    """queries: (N,L,H,E), keys: (N,S,H,E), values: (N,S,H,D).
       attn_additive: optional (L,S) additive mask (None == all_ones mask, i.e. skipped).
       keylen_additive: (N,S) additive mask (0 valid / -inf padded).
       Returns (N,L,H,D)."""
    N, L, H, E = queries.shape
    _, S, _, D = values.shape
    temp = float(softmax_temp) if softmax_temp is not None else 1.0 / sqrt(E)
    k_eff = int(min(topk, S))
    has_mask = attn_additive is not None

    # Fold softmax_temp into Q (kernel-side, per (TL,E) tile) and into the additive masks
    # (wrapper-side, tiny arrays).  Valid for temp > 0: top-k selection is invariant under
    # positive scaling and temp*(QK+mask) == (temp*Q)K + temp*mask.
    fold = temp > 0.0
    q_scale = temp if fold else 1.0
    exp_scale = 1.0 if fold else temp

    # Layout plumbing (HBM-side); K is pre-transposed so the kernel matmul is (TL,E)x(E,S).
    # TODO(synk): the q/kT/v/out transposes are extra HBM round trips; emitting (N,H,.,.)
    #             layouts from the upstream projections would remove them.
    q = jnp.transpose(queries, (0, 2, 1, 3))     # (N, H, L, E)
    kT = jnp.transpose(keys, (0, 2, 3, 1))       # (N, H, E, S)
    v = jnp.transpose(values, (0, 2, 1, 3))      # (N, H, S, D)
    if pv_bf16 and v.dtype == jnp.float32:
        v = v.astype(jnp.bfloat16)               # P in [0,1]; f32 MXU accumulation kept

    if keylen_additive is None:
        keylen_additive = jnp.zeros((N, S), jnp.float32)
    klen = keylen_additive.astype(jnp.float32)
    if fold:
        klen = klen * temp                        # exact no-op for 0/-inf masks
    klen = klen.reshape(N, 1, S)

    amask = None
    if has_mask:
        amask = attn_additive.astype(jnp.float32)
        if fold:
            amask = amask * temp

    qk_isz = jnp.dtype(queries.dtype).itemsize
    v_isz = jnp.dtype(v.dtype).itemsize
    vmem_cap = _vmem_capacity_bytes()
    budget = min(int(vmem_cap * 0.70), 100 << 20)
    TL, nbuf_kv = _choose_tiling(L, S, E, D, has_mask, qk_isz, v_isz, budget, max_l_tile)
    n_lt = L // TL
    est = _vmem_estimate(TL, S, E, D, qk_isz, v_isz, has_mask, nbuf_kv)
    vmem_limit = int(min(int(vmem_cap * 0.78), max(32 << 20, int(est * 1.4))))

    # Grid ordering: (N,H,L) keeps K^T/V resident across L tiles (minimal K/V traffic) but
    # re-fetches the (TL,S) attention-mask block every step; when the redundant mask bytes
    # exceed the extra K/V bytes of an (L,N,H) ordering, flip so the mask block is fetched
    # once per L tile instead of N*H times.
    mask_outer = False
    if has_mask and n_lt > 1:
        extra_mask_inner = (N * H - 1) * L * S * 4
        extra_kv_outer = (n_lt - 1) * N * H * (E * S * qk_isz + S * D * v_isz)
        mask_outer = extra_mask_inner > extra_kv_outer

    if mask_outer:
        grid = (n_lt, N, H)

        def ix(f):
            return lambda l, n, h: f(n, h, l)
        # Keep all axes parallel here so both v7x TensorCores stay busy (K/V may be
        # duplicated across cores if the split lands on L, but the mask dominates traffic
        # in this regime by construction).
        dims = ("parallel", "parallel", "parallel")
    else:
        grid = (N, H, n_lt)

        def ix(f):
            return f
        # L marked "arbitrary": megacore sharding splits on N/H, so the two TensorCores do
        # not duplicate the resident K^T/V DMA.
        dims = ("parallel", "parallel", "arbitrary")

    kv_kwargs = {}
    if nbuf_kv == 1:
        kv_kwargs = dict(pipeline_mode=pl.Buffered(1))   # single-buffer the resident blocks

    in_specs = [
        pl.BlockSpec((1, 1, TL, E), ix(lambda n, h, l: (n, h, l, 0))),
        pl.BlockSpec((1, 1, E, S), ix(lambda n, h, l: (n, h, 0, 0)), **kv_kwargs),
        pl.BlockSpec((1, 1, S, D), ix(lambda n, h, l: (n, h, 0, 0)), **kv_kwargs),
    ]
    args = [q, kT, v]
    if has_mask:
        in_specs.append(pl.BlockSpec((TL, S), ix(lambda n, h, l: (l, 0))))
        args.append(amask)
    in_specs.append(pl.BlockSpec((1, 1, S), ix(lambda n, h, l: (n, 0, 0))))
    args.append(klen)

    kernel_fn = _exact_topk_kernel_masked if has_mask else _exact_topk_kernel
    kernel = functools.partial(kernel_fn, topk=k_eff, q_scale=q_scale, exp_scale=exp_scale)

    out = pl.pallas_call(
        kernel,
        out_shape=jax.ShapeDtypeStruct((N, H, L, D), queries.dtype),
        grid_spec=pltpu.PrefetchScalarGridSpec(
            num_scalar_prefetch=0,
            grid=grid,
            in_specs=in_specs,
            out_specs=pl.BlockSpec((1, 1, TL, D), ix(lambda n, h, l: (n, h, l, 0))),
        ),
        compiler_params=pltpu.CompilerParams(
            dimension_semantics=dims,
            vmem_limit_bytes=vmem_limit),
    )(*args)

    return jnp.transpose(out, (0, 2, 1, 3))      # (N, L, H, D)


def exact_topk_attention_reference(queries, keys, values, attn_additive,
                                   keylen_additive, *, topk=32, softmax_temp=None):
    """Pure-JAX reference mirroring the PyTorch module (eval mode)."""
    N, L, H, E = queries.shape
    _, S, _, D = values.shape
    temp = softmax_temp if softmax_temp is not None else 1.0 / sqrt(E)
    QK = jnp.einsum('nlhe,nshe->nhls', queries, keys)
    if attn_additive is not None:
        QK = QK + attn_additive[None, None]
    if keylen_additive is not None:
        QK = QK + keylen_additive[:, None, None]
    kk = min(topk, S)
    thr = lax.top_k(QK, kk)[0][..., -1:]
    QK = jnp.where(QK >= thr, QK, -jnp.inf)
    A = jax.nn.softmax(temp * QK, axis=-1)
    return jnp.einsum('nhls,nshd->nlhd', A, values)


if __name__ == "__main__":
    # Case 1: small-topk (iterative) path, all-ones attention mask (specialized away),
    # key-length padding on the second batch element.
    N, L, S, H, E, D = 2, 8, 8, 4, 16, 16
    topk = 4
    kq, kk_, kv = jax.random.split(jax.random.PRNGKey(0), 3)
    q = jax.random.normal(kq, (N, L, H, E), dtype=jnp.float32)
    k = jax.random.normal(kk_, (N, S, H, E), dtype=jnp.float32)
    v = jax.random.normal(kv, (N, S, H, D), dtype=jnp.float32)
    key_lengths = jnp.array([S, S - 2], dtype=jnp.int32)
    keylen_additive = jnp.where(jnp.arange(S)[None, :] < key_lengths[:, None],
                                0.0, -jnp.inf).astype(jnp.float32)

    out = exact_topk_attention(q, k, v, None, keylen_additive, topk=topk)
    out = jax.block_until_ready(out)
    ref = exact_topk_attention_reference(q, k, v, None, keylen_additive, topk=topk)
    assert out.shape == (N, L, H, D)
    assert bool(jnp.allclose(out, ref, atol=1e-4, rtol=1e-4)), "case-1 mismatch vs reference"

    # Case 2: iterative path with a real additive mask, L tiling (two L tiles per (n,h)),
    # mask-inner grid order.
    N2, L2, S2, H2, E2, D2 = 2, 16, 16, 2, 16, 16
    topk2 = 12
    r1, r2, r3 = jax.random.split(jax.random.PRNGKey(1), 3)
    q2 = jax.random.normal(r1, (N2, L2, H2, E2), dtype=jnp.float32)
    k2 = jax.random.normal(r2, (N2, S2, H2, E2), dtype=jnp.float32)
    v2 = jax.random.normal(r3, (N2, S2, H2, D2), dtype=jnp.float32)
    causal2 = jnp.where(jnp.arange(S2)[None, :] <= jnp.arange(L2)[:, None],
                        0.0, -jnp.inf).astype(jnp.float32)
    keylen2 = jnp.zeros((N2, S2), dtype=jnp.float32)

    out2 = exact_topk_attention(q2, k2, v2, causal2, keylen2, topk=topk2, max_l_tile=8)
    out2 = jax.block_until_ready(out2)
    ref2 = exact_topk_attention_reference(q2, k2, v2, causal2, keylen2, topk=topk2)
    assert bool(jnp.allclose(out2, ref2, atol=1e-4, rtol=1e-4)), "case-2 mismatch vs reference"

    # Case 3: large-topk (unrolled radix-select) path, additive mask whose redundant HBM
    # traffic triggers the mask-outer (L,N,H) grid ordering, multiple L tiles.
    N3, L3, S3, H3, E3, D3 = 2, 128, 64, 2, 16, 16
    topk3 = 40
    s1, s2, s3 = jax.random.split(jax.random.PRNGKey(2), 3)
    q3 = jax.random.normal(s1, (N3, L3, H3, E3), dtype=jnp.float32)
    k3 = jax.random.normal(s2, (N3, S3, H3, E3), dtype=jnp.float32)
    v3 = jax.random.normal(s3, (N3, S3, H3, D3), dtype=jnp.float32)
    causal3 = jnp.where(jnp.arange(S3)[None, :] <= jnp.arange(L3)[:, None],
                        0.0, -jnp.inf).astype(jnp.float32)
    keylen3 = jnp.zeros((N3, S3), dtype=jnp.float32)

    out3 = exact_topk_attention(q3, k3, v3, causal3, keylen3, topk=topk3, max_l_tile=64)
    out3 = jax.block_until_ready(out3)
    ref3 = exact_topk_attention_reference(q3, k3, v3, causal3, keylen3, topk=topk3)
    assert bool(jnp.allclose(out3, ref3, atol=1e-4, rtol=1e-4)), "case-3 mismatch vs reference"

    # Case 4: bf16 P.V matmul option (halves V traffic; looser tolerance vs f32 reference).
    out4 = exact_topk_attention(q, k, v, None, keylen_additive, topk=topk, pv_bf16=True)
    out4 = jax.block_until_ready(out4)
    assert bool(jnp.allclose(out4, ref, atol=3e-2, rtol=3e-2)), "case-4 mismatch vs reference"

    print("KERNEL_OK")
</pallas_src>

<mosaic_0001>
module attributes {stable_mosaic.version = 11 : i64} {
  func.func @_exact_topk_kernel(%arg0: i32, %arg1: i32, %arg2: i32, %arg3: memref<1x1x8x16xf32, #tpu.memory_space<vmem>>, %arg4: memref<1x1x16x8xf32, #tpu.memory_space<vmem>>, %arg5: memref<1x1x8x16xf32, #tpu.memory_space<vmem>>, %arg6: memref<1x1x8xf32, #tpu.memory_space<vmem>>, %arg7: memref<1x1x8x16xf32, #tpu.memory_space<vmem>>) attributes {dimension_semantics = [#tpu.dimension_semantics<parallel>, #tpu.dimension_semantics<parallel>, #tpu.dimension_semantics<arbitrary>], iteration_bounds = array<i64: 2, 4, 1>, scalar_prefetch = 0 : i64, scratch_operands = 0 : i64, tpu.core_type = #tpu.core_type<tc>, window_params = [{transform_indices = @transform_0, window_bounds = array<i64: 1, 1, 8, 16>}, {transform_indices = @transform_1, window_bounds = array<i64: 1, 1, 16, 8>}, {transform_indices = @transform_2, window_bounds = array<i64: 1, 1, 8, 16>}, {transform_indices = @transform_3, window_bounds = array<i64: 1, 1, 8>}, {transform_indices = @transform_4, window_bounds = array<i64: 1, 1, 8, 16>}]} {
    %c0 = arith.constant 0 : index
    %c0_0 = arith.constant 0 : index
    %c0_1 = arith.constant 0 : index
    %c0_2 = arith.constant 0 : index
    %0 = vector.load %arg3[%c0, %c0_0, %c0_1, %c0_2] : memref<1x1x8x16xf32, #tpu.memory_space<vmem>>, vector<1x1x8x16xf32>
    %1 = vector.shape_cast %0 : vector<1x1x8x16xf32> to vector<8x16xf32>
    %c0_3 = arith.constant 0 : index
    %c0_4 = arith.constant 0 : index
    %c0_5 = arith.constant 0 : index
    %c0_6 = arith.constant 0 : index
    %2 = vector.load %arg4[%c0_3, %c0_4, %c0_5, %c0_6] : memref<1x1x16x8xf32, #tpu.memory_space<vmem>>, vector<1x1x16x8xf32>
    %3 = vector.shape_cast %2 : vector<1x1x16x8xf32> to vector<16x8xf32>
    %c0_7 = arith.constant 0 : index
    %c0_8 = arith.constant 0 : index
    %c0_9 = arith.constant 0 : index
    %c0_10 = arith.constant 0 : index
    %4 = vector.load %arg5[%c0_7, %c0_8, %c0_9, %c0_10] : memref<1x1x8x16xf32, #tpu.memory_space<vmem>>, vector<1x1x8x16xf32>
    %5 = vector.shape_cast %4 : vector<1x1x8x16xf32> to vector<8x16xf32>
    %c0_11 = arith.constant 0 : index
    %c0_12 = arith.constant 0 : index
    %c0_13 = arith.constant 0 : index
    %6 = vector.load %arg6[%c0_11, %c0_12, %c0_13] : memref<1x1x8xf32, #tpu.memory_space<vmem>>, vector<1x1x8xf32>
    %7 = vector.shape_cast %6 : vector<1x1x8xf32> to vector<1x8xf32>
    %cst = arith.constant 2.500000e-01 : f32
    %8 = vector.broadcast %cst : f32 to vector<8x16xf32>
    %9 = arith.mulf %1, %8 : vector<8x16xf32>
    %cst_14 = arith.constant dense<0.000000e+00> : vector<8x8xf32>
    %10 = tpu.matmul %9, %3, %cst_14 {dimension_numbers = #tpu.dot_dimension_numbers<[1], [0], [0], [1], [0, 0, 1, 1], [], []>} : vector<8x16xf32>, vector<16x8xf32>, vector<8x8xf32> -> vector<8x8xf32>
    %11 = vector.broadcast %7 : vector<1x8xf32> to vector<8x8xf32>
    %12 = arith.addf %10, %11 : vector<8x8xf32>
    %cst_15 = arith.constant dense<0xFF800000> : vector<8xf32>
    %13 = vector.multi_reduction <maximumf>, %12, %cst_15 [1] : vector<8x8xf32> to vector<8xf32>
    %14 = vector.shape_cast %13 : vector<8xf32> to vector<8x1xf32>
    %15 = vector.broadcast %14 : vector<8x1xf32> to vector<8x8xf32>
    %16 = arith.subf %12, %15 : vector<8x8xf32>
    %17 = math.exp %16 : vector<8x8xf32>
    %18 = vector.broadcast %14 : vector<8x1xf32> to vector<8x8xf32>
    %19 = arith.cmpf oge, %12, %18 : vector<8x8xf32>
    %cst_16 = arith.constant 0xFF800000 : f32
    %20 = vector.broadcast %cst_16 : f32 to vector<8x8xf32>
    %21 = arith.select %19, %20, %12 : vector<8x8xi1>, vector<8x8xf32>
    %cst_17 = arith.constant dense<0xFF800000> : vector<8xf32>
    %22 = vector.multi_reduction <maximumf>, %21, %cst_17 [1] : vector<8x8xf32> to vector<8xf32>
    %23 = vector.shape_cast %22 : vector<8xf32> to vector<8x1xf32>
    %24 = vector.broadcast %23 : vector<8x1xf32> to vector<8x8xf32>
    %25 = arith.cmpf oge, %21, %24 : vector<8x8xf32>
    %cst_18 = arith.constant 0xFF800000 : f32
    %26 = vector.broadcast %cst_18 : f32 to vector<8x8xf32>
    %27 = arith.select %25, %26, %21 : vector<8x8xi1>, vector<8x8xf32>
    %cst_19 = arith.constant dense<0xFF800000> : vector<8xf32>
    %28 = vector.multi_reduction <maximumf>, %27, %cst_19 [1] : vector<8x8xf32> to vector<8xf32>
    %29 = vector.shape_cast %28 : vector<8xf32> to vector<8x1xf32>
    %30 = vector.broadcast %29 : vector<8x1xf32> to vector<8x8xf32>
    %31 = arith.cmpf oge, %27, %30 : vector<8x8xf32>
    %cst_20 = arith.constant 0xFF800000 : f32
    %32 = vector.broadcast %cst_20 : f32 to vector<8x8xf32>
    %33 = arith.select %31, %32, %27 : vector<8x8xi1>, vector<8x8xf32>
    %cst_21 = arith.constant dense<0xFF800000> : vector<8xf32>
    %34 = vector.multi_reduction <maximumf>, %33, %cst_21 [1] : vector<8x8xf32> to vector<8xf32>
    %35 = vector.shape_cast %34 : vector<8xf32> to vector<8x1xf32>
    %36 = vector.broadcast %35 : vector<8x1xf32> to vector<8x8xf32>
    %37 = arith.cmpf oge, %12, %36 : vector<8x8xf32>
    %cst_22 = arith.constant 0.000000e+00 : f32
    %38 = vector.broadcast %cst_22 : f32 to vector<8x8xf32>
    %39 = arith.select %37, %17, %38 : vector<8x8xi1>, vector<8x8xf32>
    %cst_23 = arith.constant dense<0.000000e+00> : vector<8xf32>
    %40 = vector.multi_reduction <add>, %39, %cst_23 [1] : vector<8x8xf32> to vector<8xf32>
    %41 = vector.shape_cast %40 : vector<8xf32> to vector<8x1xf32>
    %42 = tpu.reciprocal %41 {approx = true} : vector<8x1xf32> -> vector<8x1xf32>
    %43 = arith.mulf %41, %42 : vector<8x1xf32>
    %cst_24 = arith.constant 2.000000e+00 : f32
    %44 = vector.broadcast %cst_24 : f32 to vector<8x1xf32>
    %45 = arith.subf %44, %43 : vector<8x1xf32>
    %46 = arith.mulf %42, %45 : vector<8x1xf32>
    %cst_25 = arith.constant dense<0.000000e+00> : vector<8x16xf32>
    %47 = tpu.matmul %39, %5, %cst_25 {dimension_numbers = #tpu.dot_dimension_numbers<[1], [0], [0], [1], [0, 0, 1, 1], [], []>} : vector<8x8xf32>, vector<8x16xf32>, vector<8x16xf32> -> vector<8x16xf32>
    %48 = vector.broadcast %46 : vector<8x1xf32> to vector<8x16xf32>
    %49 = arith.mulf %47, %48 : vector<8x16xf32>
    %c0_26 = arith.constant 0 : index
    %c0_27 = arith.constant 0 : index
    %c0_28 = arith.constant 0 : index
    %c0_29 = arith.constant 0 : index
    %50 = vector.load %arg7[%c0_26, %c0_27, %c0_28, %c0_29] : memref<1x1x8x16xf32, #tpu.memory_space<vmem>>, vector<1x1x8x16xf32>
    %51 = vector.shape_cast %50 : vector<1x1x8x16xf32> to vector<8x16xf32>
    %52 = vector.shape_cast %49 : vector<8x16xf32> to vector<1x1x8x16xf32>
    tpu.vector_store %arg7[%c0_26, %c0_27, %c0_28, %c0_29], %52 {strides = array<i32>} : memref<1x1x8x16xf32, #tpu.memory_space<vmem>>, vector<1x1x8x16xf32>,
    return
  }
  func.func @transform_0(%arg0: i32, %arg1: i32, %arg2: i32) -> (i32, i32, i32, i32) {
    %c0_i32 = arith.constant 0 : i32
    %c0_i32_0 = arith.constant 0 : i32
    return %arg0, %arg1, %arg2, %c0_i32 : i32, i32, i32, i32
  }
  func.func @transform_1(%arg0: i32, %arg1: i32, %arg2: i32) -> (i32, i32, i32, i32) {
    %c0_i32 = arith.constant 0 : i32
    %c0_i32_0 = arith.constant 0 : i32
    %c0_i32_1 = arith.constant 0 : i32
    return %arg0, %arg1, %c0_i32, %c0_i32_0 : i32, i32, i32, i32
  }
  func.func @transform_2(%arg0: i32, %arg1: i32, %arg2: i32) -> (i32, i32, i32, i32) {
    %c0_i32 = arith.constant 0 : i32
    %c0_i32_0 = arith.constant 0 : i32
    %c0_i32_1 = arith.constant 0 : i32
    return %arg0, %arg1, %c0_i32, %c0_i32_0 : i32, i32, i32, i32
  }
  func.func @transform_3(%arg0: i32, %arg1: i32, %arg2: i32) -> (i32, i32, i32) {
    %c0_i32 = arith.constant 0 : i32
    %c0_i32_0 = arith.constant 0 : i32
    %c0_i32_1 = arith.constant 0 : i32
    return %arg0, %c0_i32, %c0_i32_0 : i32, i32, i32
  }
  func.func @transform_4(%arg0: i32, %arg1: i32, %arg2: i32) -> (i32, i32, i32, i32) {
    %c0_i32 = arith.constant 0 : i32
    %c0_i32_0 = arith.constant 0 : i32
    return %arg0, %arg1, %arg2, %c0_i32 : i32, i32, i32, i32
  }
}

</mosaic_0001>

<llo_original>
// kernel: tpu_custom_call.1
$region0: #{tpu_custom_call.1}
  #allocation0 [shape = 'u32[]', space=smem, size = 0x4, offset = 0x4, fixed_abs, tag = 'smem constant byte address 0x4 - core index']
  #allocation1 [shape = 'u32[144,128]{1,0:T(1,128)}', space=vmem, size = 0x12000, scoped, tag = 'internal scratch']
  %s0 = inlined_call_operand.vmem [shape: f32[2,4,8,16], index: 0, kind: input, shape index: {}]
  %s1 = inlined_call_operand.vmem [shape: f32[2,4,16,8], index: 1, kind: input, shape index: {}]
  %s2 = inlined_call_operand.vmem [shape: f32[2,4,8,16], index: 2, kind: input, shape index: {}]
  %s3 = inlined_call_operand.vmem [shape: f32[2,1,8], index: 3, kind: input, shape index: {}]
  %s4 = inlined_call_operand.hbm [shape: f32[2,4,8,16], index: 4, kind: output, shape index: {}]
  %s5 = sld [smem:[#allocation0]]
  $region49: #{tpu_custom_call.1} parent=0
    _
  %s7 = ssub.s32 1, %s5
  %s8 = scalar_select 0, %s7, %s5
  $region1: #{tpu_custom_call.1} parent=0
    #allocation2 [shape = 'u8[8192]{0}', space=vmem, size = 0x2000, scoped, tag = 'output window, operand 0']
    #allocation3 [shape = 's32[2]{0}', space=sflag, size = 0x8, scoped, tag = 'scoped memory for tpu_custom_call.1']
    %9 = vsyncpa [#allocation3], 0
    %s10 = scalar_lea.sflag [#allocation3], 1
    %11 = vsyncpa %s10, 0
    loop: start=0, step=1, limit=10
    $region2: #{tpu_custom_call.1} parent=1 // loop_pre_header
      _
    $region3: #{tpu_custom_call.1} parent=1 // loop_header
      %s13 = sphi 0, %s17
      %p14 = scmp.ge.s32.totalorder %s13, 10
      %s20 = sphi 0, %s39
      %s21 = sphi 0, %s35
      %s22 = sphi 0, %s31
      %s23 = sphi 0, %s20
      %s24 = sphi 0, %s21
      %s25 = sphi 0, %s22
      %s26 = sphi 0, %s23
      %s27 = sphi 0, %s24
      %s28 = sphi 0, %s25
      %s46 = sphi 0, %s48
      %s49 = sphi 0, %s46
      %s50 = sphi 0, %s49
      %s66 = sphi 0, %s50
      %s74 = sphi 0, %s76
      %s77 = sphi 0, %s74
      %s78 = sphi 0, %s77
      %s94 = sphi 0, %s78
      %s102 = sphi 0, %s104
      %s105 = sphi 0, %s102
      %s106 = sphi 0, %s105
      %s122 = sphi 0, %s106
      %s128 = sphi 0, %s130
      %s131 = sphi 0, %s128
      %s132 = sphi 0, %s131
      %s148 = sphi 0, %s132
      %s158 = sphi 0, %s160
      %s161 = sphi 0, %s158
      %s162 = sphi 0, %s161
      %s178 = sphi 0, %s162
    $region4: #{tpu_custom_call.1} parent=1 // loop_header_branch
      %16 = sbr.rel (%p14) target = $region8
    $region5: #{tpu_custom_call.1} parent=1 // loop_body
      %s18 = ssub.s32 %s13, 1
      %s19 = ssub.s32 %s13, 2
      %s29 = sadd.s32 1, %s22
      %p30 = scmp.ge.s32.totalorder %s29, 1
      %s31 = scalar_select %p30, 0, %s29
      %s32 = sadd.s32 1, %s21
      %s33 = scalar_select %p30, %s32, %s21
      %p34 = scmp.ge.s32.totalorder %s33, 4
      %s35 = scalar_select %p34, 0, %s33
      %s36 = sadd.s32 1, %s20
      %s37 = scalar_select %p34, %s36, %s20
      %p38 = scmp.ge.s32.totalorder %s37, 2
      %s39 = scalar_select %p38, 0, %s37
      %s40 = ssub.s32 %s20, %s39
      %s41 = ssub.s32 %s21, %s35
      %s42 = sor.u32 %s40, %s41
      %s43 = ssub.s32 %s22, %s31
      %s44 = sor.u32 %s42, %s43
      %p45 = scmp.eq.s32.totalorder %s44, 0
      %s47 = sadd.s32 %s46, 1
      %s48 = scalar_select %p45, %s46, %s47
      %p51 = pneg %p45
      %p52 = scmp.eq.s32.totalorder %s13, 7
      %p53 = por %p51, %p52
      %p54 = scmp.ne.s32.totalorder %s46, %s49
      %p55 = scmp.eq.s32.totalorder %s13, 0
      %p56 = por %p54, %p55
      %p57 = scmp.ne.s32.totalorder %s46, %s49
      %p58 = scmp.eq.s32.totalorder %s18, 7
      %p59 = por %p57, %p58
      %p60 = scmp.ne.s32.totalorder %s49, %s50
      %p61 = scmp.eq.s32.totalorder %s18, 0
      %p62 = por %p60, %p61
      %p63 = scmp.ne.s32.totalorder %s49, %s50
      %p64 = scmp.eq.s32.totalorder %s19, 7
      %p65 = por %p63, %p64
      %p67 = scmp.ne.s32.totalorder %s50, %s66
      %p68 = scmp.eq.s32.totalorder %s19, 0
      %p69 = por %p67, %p68
      %s70 = ssub.s32 %s20, %s39
      %s71 = ssub.s32 %s21, %s35
      %s72 = sor.u32 %s70, %s71
      %p73 = scmp.eq.s32.totalorder %s72, 0
      %s75 = sadd.s32 %s74, 1
      %s76 = scalar_select %p73, %s74, %s75
      %p79 = pneg %p73
      %p80 = scmp.eq.s32.totalorder %s13, 7
      %p81 = por %p79, %p80
      %p82 = scmp.ne.s32.totalorder %s74, %s77
      %p83 = scmp.eq.s32.totalorder %s13, 0
      %p84 = por %p82, %p83
      %p85 = scmp.ne.s32.totalorder %s74, %s77
      %p86 = scmp.eq.s32.totalorder %s18, 7
      %p87 = por %p85, %p86
      %p88 = scmp.ne.s32.totalorder %s77, %s78
      %p89 = scmp.eq.s32.totalorder %s18, 0
      %p90 = por %p88, %p89
      %p91 = scmp.ne.s32.totalorder %s77, %s78
      %p92 = scmp.eq.s32.totalorder %s19, 7
      %p93 = por %p91, %p92
      %p95 = scmp.ne.s32.totalorder %s78, %s94
      %p96 = scmp.eq.s32.totalorder %s19, 0
      %p97 = por %p95, %p96
      %s98 = ssub.s32 %s20, %s39
      %s99 = ssub.s32 %s21, %s35
      %s100 = sor.u32 %s98, %s99
      %p101 = scmp.eq.s32.totalorder %s100, 0
      %s103 = sadd.s32 %s102, 1
      %s104 = scalar_select %p101, %s102, %s103
      %p107 = pneg %p101
      %p108 = scmp.eq.s32.totalorder %s13, 7
      %p109 = por %p107, %p108
      %p110 = scmp.ne.s32.totalorder %s102, %s105
      %p111 = scmp.eq.s32.totalorder %s13, 0
      %p112 = por %p110, %p111
      %p113 = scmp.ne.s32.totalorder %s102, %s105
      %p114 = scmp.eq.s32.totalorder %s18, 7
      %p115 = por %p113, %p114
      %p116 = scmp.ne.s32.totalorder %s105, %s106
      %p117 = scmp.eq.s32.totalorder %s18, 0
      %p118 = por %p116, %p117
      %p119 = scmp.ne.s32.totalorder %s105, %s106
      %p120 = scmp.eq.s32.totalorder %s19, 7
      %p121 = por %p119, %p120
      %p123 = scmp.ne.s32.totalorder %s106, %s122
      %p124 = scmp.eq.s32.totalorder %s19, 0
      %p125 = por %p123, %p124
      %s126 = ssub.s32 %s20, %s39
      %p127 = scmp.eq.s32.totalorder %s126, 0
      %s129 = sadd.s32 %s128, 1
      %s130 = scalar_select %p127, %s128, %s129
      %p133 = pneg %p127
      %p134 = scmp.eq.s32.totalorder %s13, 7
      %p135 = por %p133, %p134
      %p136 = scmp.ne.s32.totalorder %s128, %s131
      %p137 = scmp.eq.s32.totalorder %s13, 0
      %p138 = por %p136, %p137
      %p139 = scmp.ne.s32.totalorder %s128, %s131
      %p140 = scmp.eq.s32.totalorder %s18, 7
      %p141 = por %p139, %p140
      %p142 = scmp.ne.s32.totalorder %s131, %s132
      %p143 = scmp.eq.s32.totalorder %s18, 0
      %p144 = por %p142, %p143
      %p145 = scmp.ne.s32.totalorder %s131, %s132
      %p146 = scmp.eq.s32.totalorder %s19, 7
      %p147 = por %p145, %p146
      %p149 = scmp.ne.s32.totalorder %s132, %s148
      %p150 = scmp.eq.s32.totalorder %s19, 0
      %p151 = por %p149, %p150
      %s152 = ssub.s32 %s20, %s39
      %s153 = ssub.s32 %s21, %s35
      %s154 = sor.u32 %s152, %s153
      %s155 = ssub.s32 %s22, %s31
      %s156 = sor.u32 %s154, %s155
      %p157 = scmp.eq.s32.totalorder %s156, 0
      %s159 = sadd.s32 %s158, 1
      %s160 = scalar_select %p157, %s158, %s159
      %p163 = pneg %p157
      %p164 = scmp.eq.s32.totalorder %s13, 7
      %p165 = por %p163, %p164
      %p166 = scmp.ne.s32.totalorder %s158, %s161
      %p167 = scmp.eq.s32.totalorder %s13, 0
      %p168 = por %p166, %p167
      %p169 = scmp.ne.s32.totalorder %s158, %s161
      %p170 = scmp.eq.s32.totalorder %s18, 7
      %p171 = por %p169, %p170
      %p172 = scmp.ne.s32.totalorder %s161, %s162
      %p173 = scmp.eq.s32.totalorder %s18, 0
      %p174 = por %p172, %p173
      %p175 = scmp.ne.s32.totalorder %s161, %s162
      %p176 = scmp.eq.s32.totalorder %s19, 7
      %p177 = por %p175, %p176
      %p179 = scmp.ne.s32.totalorder %s162, %s178
      %p180 = scmp.eq.s32.totalorder %s19, 0
      %p181 = por %p179, %p180
      %p182 = scmp.le.s32.totalorder 1, %s13
      %p183 = scmp.lt.s32.totalorder %s13, 9
      %p184 = pnand %p182, %p183
      %p185 = pneg %p184
      // Predicated region
      $region9: #{tpu_custom_call.1} parent=5 // pred_check
        _
      $region10: #{tpu_custom_call.1} parent=5 // pred_check_branch
        %187 = sbr.rel (%p184) target = $region12
      $region11: #{tpu_custom_call.1} parent=5 // pred_region
        %s188 = ssub.s32 %s13, 1
      $region12: #{tpu_custom_call.1} parent=5 // pred_fallthru
        _
      %p189 = scmp.lt.s32.totalorder %s13, 8
      // Predicated region
      $region13: #{tpu_custom_call.1} parent=5 // pred_check
        %p190 = pneg %p189
      $region14: #{tpu_custom_call.1} parent=5 // pred_check_branch
        %192 = sbr.rel (%p190) target = $region16
      $region15: #{tpu_custom_call.1} parent=5 // pred_region
        // Predicated region
        $region17: #{tpu_custom_call.1} parent=15 // pred_check
          %p193 = pneg %p56
        $region18: #{tpu_custom_call.1} parent=15 // pred_check_branch
          %195 = sbr.rel (%p193) target = $region20
        $region19: #{tpu_custom_call.1} parent=15 // pred_region
          %p196 = scmp.lt.s32.totalorder %s20, 1
          %s197 = scalar_select %p196, %s20, 1
          %p198 = scmp.lt.s32.totalorder %s21, 3
          %s199 = scalar_select %p198, %s21, 3
          %p200 = scmp.lt.s32.totalorder %s22, 0
          %s201 = scalar_select %p200, %s22, 0
          %s202 = sadd.s32 %s201, %s199
          %s203 = smul.addr %s197, 4
          %s204 = sadd.s32 %s202, %s203
          %s205 = smul.addr %s204, 8
          %s206 = scalar_lea.vmem %s0, %s205
        $region20: #{tpu_custom_call.1} parent=15 // pred_fallthru
          _
        // Predicated region
        $region21: #{tpu_custom_call.1} parent=15 // pred_check
          %p207 = pneg %p84
        $region22: #{tpu_custom_call.1} parent=15 // pred_check_branch
          %209 = sbr.rel (%p207) target = $region24
        $region23: #{tpu_custom_call.1} parent=15 // pred_region
          %p210 = scmp.lt.s32.totalorder %s20, 1
          %s211 = scalar_select %p210, %s20, 1
          %p212 = scmp.lt.s32.totalorder %s21, 3
          %s213 = scalar_select %p212, %s21, 3
          %s214 = smul.addr %s213, 2
          %s215 = smul.addr %s211, 8
          %s216 = sadd.s32 %s214, %s215
          %s217 = smul.addr %s216, 8
          %s218 = scalar_lea.vmem %s1, %s217
        $region24: #{tpu_custom_call.1} parent=15 // pred_fallthru
          _
        // Predicated region
        $region25: #{tpu_custom_call.1} parent=15 // pred_check
          %p219 = pneg %p112
        $region26: #{tpu_custom_call.1} parent=15 // pred_check_branch
          %221 = sbr.rel (%p219) target = $region28
        $region27: #{tpu_custom_call.1} parent=15 // pred_region
          %p222 = scmp.lt.s32.totalorder %s20, 1
          %s223 = scalar_select %p222, %s20, 1
          %p224 = scmp.lt.s32.totalorder %s21, 3
          %s225 = scalar_select %p224, %s21, 3
          %s226 = smul.addr %s223, 4
          %s227 = sadd.s32 %s225, %s226
          %s228 = smul.addr %s227, 8
          %s229 = scalar_lea.vmem %s2, %s228
        $region28: #{tpu_custom_call.1} parent=15 // pred_fallthru
          _
        // Predicated region
        $region29: #{tpu_custom_call.1} parent=15 // pred_check
          %p230 = pneg %p138
        $region30: #{tpu_custom_call.1} parent=15 // pred_check_branch
          %232 = sbr.rel (%p230) target = $region32
        $region31: #{tpu_custom_call.1} parent=15 // pred_region
          %p233 = scmp.lt.s32.totalorder %s20, 1
          %s234 = scalar_select %p233, %s20, 1
          %s235 = scalar_lea.vmem %s3, %s234
        $region32: #{tpu_custom_call.1} parent=15 // pred_fallthru
          _
      $region16: #{tpu_custom_call.1} parent=5 // pred_fallthru
        _
      %p236 = scmp.le.s32.totalorder 1, %s13
      %p237 = scmp.lt.s32.totalorder %s13, 9
      %p238 = pnand %p236, %p237
      %p239 = pneg %p238
      // Predicated region
      $region33: #{tpu_custom_call.1} parent=5 // pred_check
        _
      $region34: #{tpu_custom_call.1} parent=5 // pred_check_branch
        %241 = sbr.rel (%p238) target = $region36
      $region35: #{tpu_custom_call.1} parent=5 // pred_region
        %s242 = ssub.s32 %s13, 1
        %p243 = scmp.lt.s32.totalorder %s23, 1
        %s244 = scalar_select %p243, %s23, 1
        %p245 = scmp.lt.s32.totalorder %s24, 3
        %s246 = scalar_select %p245, %s24, 3
        %p247 = scmp.lt.s32.totalorder %s25, 0
        %s248 = scalar_select %p247, %s25, 0
        %s249 = sadd.s32 %s248, %s246
        %s250 = smul.addr %s244, 4
        %s251 = sadd.s32 %s249, %s250
        %s252 = smul.addr %s251, 8
        %s253 = scalar_lea.vmem %s0, %s252
        %p254 = pneg %p62
        %p255 = pneg %p59
        %p256 = scmp.lt.s32.totalorder %s23, 1
        %s257 = scalar_select %p256, %s23, 1
        %p258 = scmp.lt.s32.totalorder %s24, 3
        %s259 = scalar_select %p258, %s24, 3
        %s260 = smul.addr %s259, 2
        %s261 = smul.addr %s257, 8
        %s262 = sadd.s32 %s260, %s261
        %s263 = smul.addr %s262, 8
        %s264 = scalar_lea.vmem %s1, %s263
        %p265 = pneg %p90
        %p266 = pneg %p87
        %p267 = scmp.lt.s32.totalorder %s23, 1
        %s268 = scalar_select %p267, %s23, 1
        %p269 = scmp.lt.s32.totalorder %s24, 3
        %s270 = scalar_select %p269, %s24, 3
        %s271 = smul.addr %s268, 4
        %s272 = sadd.s32 %s270, %s271
        %s273 = smul.addr %s272, 8
        %s274 = scalar_lea.vmem %s2, %s273
        %p275 = pneg %p118
        %p276 = pneg %p115
        %p277 = scmp.lt.s32.totalorder %s23, 1
        %s278 = scalar_select %p277, %s23, 1
        %s279 = scalar_lea.vmem %s3, %s278
        %p280 = pneg %p144
        %p281 = pneg %p141
        %p282 = pneg %p174
        %p283 = pneg %p171
        %s284 = sand.u32 %s161, 1
        %s285 = scalar_lea.sflag [#allocation3], %s284
        %s286 = sand.u32 %s161, 1
        %s287 = smul.addr %s286, 8
        %s288 = scalar_lea.vmem [#allocation2], %s287
        %p289 = scmp.lt.s32.totalorder %s23, 1
        %s290 = scalar_select %p289, %s23, 1
        %p291 = scmp.lt.s32.totalorder %s24, 3
        %s292 = scalar_select %p291, %s24, 3
        %p293 = scmp.lt.s32.totalorder %s25, 0
        %s294 = scalar_select %p293, %s25, 0
        %s295 = sadd.s32 %s294, %s292
        %s296 = smul.addr %s290, 4
        %s297 = sadd.s32 %s295, %s296
        %s298 = smul.addr %s297, 8
        %s299 = scalar_lea.vmem %s0, %s298
        %p300 = scmp.lt.s32.totalorder %s23, 1
        %s301 = scalar_select %p300, %s23, 1
        %p302 = scmp.lt.s32.totalorder %s24, 3
        %s303 = scalar_select %p302, %s24, 3
        %s304 = smul.addr %s303, 2
        %s305 = smul.addr %s301, 8
        %s306 = sadd.s32 %s304, %s305
        %s307 = smul.addr %s306, 8
        %s308 = scalar_lea.vmem %s1, %s307
        %p309 = scmp.lt.s32.totalorder %s23, 1
        %s310 = scalar_select %p309, %s23, 1
        %p311 = scmp.lt.s32.totalorder %s24, 3
        %s312 = scalar_select %p311, %s24, 3
        %s313 = smul.addr %s310, 4
        %s314 = sadd.s32 %s312, %s313
        %s315 = smul.addr %s314, 8
        %s316 = scalar_lea.vmem %s2, %s315
        %p317 = scmp.lt.s32.totalorder %s23, 1
        %s318 = scalar_select %p317, %s23, 1
        %s319 = scalar_lea.vmem %s3, %s318
        %v320 = vld [vmem:[%s299] sm:$0xff]
        %v321 = vld [vmem:[%s308] sm:$0xff]
        %v322 = vld [vmem:[%s308 + $0x8] sm:$0xff]
        %v323 = vld [vmem:[%s316] sm:$0xff]
        %v324 = vld [vmem:[%s319] sm:$0x1]
        %v325 = vmul.f32 %v320, 0.25
        %v327 = vlaneseq
        %v328 = vshrl.u32 %v327, 7
        %v329 = vsub.s32 0, %v328
        %v330 = vrot.slane %v324, %v329
        %vm332 = vcmask 130048
        %v334 = vsel %vm332, %v325, 0
        %336 = vmatprep.subr.mxu0 0.0
        %337 = vmatpush1.msra.mxu0 0.0
        %338 = vmatprep.subr.mxu0 0.0
        %339 = vmatpush1.msra.mxu0 0.0
        %340 = vmatprep.subr.mxu0 0.0
        %341 = vmatpush1.msra.mxu0 0.0
        %342 = vmatprep.subr.mxu0 0.0
        %343 = vmatpush1.msra.mxu0 0.0
        %344 = vmatprep.subr.mxu0 0.0
        %345 = vmatpush1.msra.mxu0 0.0
        %346 = vmatprep.subr.mxu0 0.0
        %347 = vmatpush1.msra.mxu0 0.0
        %348 = vmatprep.subr.mxu0 0.0
        %349 = vmatpush1.msra.mxu0 0.0
        %350 = vmatprep.subr.mxu0 0.0
        %351 = vmatpush1.msra.mxu0 0.0
        %352 = vmatprep.subr.mxu0 0.0
        %353 = vmatpush1.msra.mxu0 0.0
        %354 = vmatprep.subr.mxu0 0.0
        %355 = vmatpush1.msra.mxu0 0.0
        %356 = vmatprep.subr.mxu0 0.0
        %357 = vmatpush1.msra.mxu0 0.0
        %358 = vmatprep.subr.mxu0 0.0
        %359 = vmatpush1.msra.mxu0 0.0
        %360 = vmatprep.subr.mxu0 0.0
        %361 = vmatpush1.msra.mxu0 0.0
        %362 = vmatprep.subr.mxu0 0.0
        %363 = vmatpush1.msra.mxu0 0.0
        %364 = vmatprep.subr.mxu0 0.0
        %365 = vmatpush1.msra.mxu0 %v322
        %366 = vmatprep.subr.mxu0 0.0
        %367 = vmatpush1.msra.mxu0 %v321
        %368 = vmatprep.subr.mxu0 0.0
        %369 = vmatpush2.msra.mxu0 0.0
        %370 = vmatprep.subr.mxu0 0.0
        %371 = vmatpush2.msra.mxu0 0.0
        %372 = vmatprep.subr.mxu0 0.0
        %373 = vmatpush2.msra.mxu0 0.0
        %374 = vmatprep.subr.mxu0 0.0
        %375 = vmatpush2.msra.mxu0 0.0
        %376 = vmatprep.subr.mxu0 0.0
        %377 = vmatpush2.msra.mxu0 0.0
        %378 = vmatprep.subr.mxu0 0.0
        %379 = vmatpush2.msra.mxu0 0.0
        %380 = vmatprep.subr.mxu0 0.0
        %381 = vmatpush2.msra.mxu0 0.0
        %382 = vmatprep.subr.mxu0 0.0
        %383 = vmatpush2.msra.mxu0 0.0
        %384 = vmatprep.subr.mxu0 0.0
        %385 = vmatpush2.msra.mxu0 0.0
        %386 = vmatprep.subr.mxu0 0.0
        %387 = vmatpush2.msra.mxu0 0.0
        %388 = vmatprep.subr.mxu0 0.0
        %389 = vmatpush2.msra.mxu0 0.0
        %390 = vmatprep.subr.mxu0 0.0
        %391 = vmatpush2.msra.mxu0 0.0
        %392 = vmatprep.subr.mxu0 0.0
        %393 = vmatpush2.msra.mxu0 0.0
        %394 = vmatprep.subr.mxu0 0.0
        %395 = vmatpush2.msra.mxu0 0.0
        %396 = vmatprep.subr.mxu0 0.0
        %397 = vmatpush2.msra.mxu0 0.0
        %398 = vmatprep.subr.mxu0 0.0
        %399 = vmatpush2.msra.mxu0 0.0
        %400 = vmatprep.mubr.f32.mxu0 0.0
        %401 = vmatmul.mubr.f32.gmra.mxu0 %v334
        %v402 = vpop.f32.mrf.mxu0
        %v403 = vadd.f32 %v330, %v402
        %v404 = vpop.f32.mrf.mxu0
        %405 = vdwg.mxu0
        %vm406 = vcmask 64512
        %v407 = vsel %vm406, %v403, -inf
        %408 = vmax.xlane.f32.xlu0 %v407
        %v409 = vpop.xlane.xlu0 %408
        %v410 = vsub.f32 %v403, %v409
        %v411 = vmul.f32 %v410, 1.442695
        %v412 = vpow.pop %v411
        %vm413 = vcmp.ge.f32.partialorder %v403, %v409
        %v414 = vsel %vm413, -inf, %v403
        %v415 = vsel %vm406, %v414, -inf
        %416 = vmax.xlane.f32.xlu0 %v415
        %v417 = vpop.xlane.xlu0 %416
        %vm418 = vcmp.ge.f32.partialorder %v414, %v417
        %v419 = vsel %vm418, -inf, %v414
        %v420 = vsel %vm406, %v419, -inf
        %421 = vmax.xlane.f32.xlu0 %v420
        %v422 = vpop.xlane.xlu0 %421
        %vm423 = vcmp.ge.f32.partialorder %v419, %v422
        %v424 = vsel %vm423, -inf, %v419
        %v425 = vsel %vm406, %v424, -inf
        %426 = vmax.xlane.f32.xlu0 %v425
        %v427 = vpop.xlane.xlu0 %426
        %vm428 = vcmp.ge.f32.partialorder %v403, %v427
        %v429 = vsel %vm428, %v412, 0.0
        %v430 = vsel %vm406, %v429, 0.0
        %431 = vadd.xlane.f32.xlu0 %v430
        %v432 = vpop.xlane.xlu0 %431
        %v433 = vrcp.pop %v432
        %v434 = vmul.f32 %v432, %v433
        %v435 = vsub.f32 2.0, %v434
        %v436 = vmul.f32 %v433, %v435
        %v438 = vsel %vm406, %v429, 0
        %440 = vmatprep.subr.mxu0 0.0
        %441 = vmatpush1.msra.mxu0 0.0
        %442 = vmatprep.subr.mxu0 0.0
        %443 = vmatpush1.msra.mxu0 0.0
        %444 = vmatprep.subr.mxu0 0.0
        %445 = vmatpush1.msra.mxu0 0.0
        %446 = vmatprep.subr.mxu0 0.0
        %447 = vmatpush1.msra.mxu0 0.0
        %448 = vmatprep.subr.mxu0 0.0
        %449 = vmatpush1.msra.mxu0 0.0
        %450 = vmatprep.subr.mxu0 0.0
        %451 = vmatpush1.msra.mxu0 0.0
        %452 = vmatprep.subr.mxu0 0.0
        %453 = vmatpush1.msra.mxu0 0.0
        %454 = vmatprep.subr.mxu0 0.0
        %455 = vmatpush1.msra.mxu0 0.0
        %456 = vmatprep.subr.mxu0 0.0
        %457 = vmatpush1.msra.mxu0 0.0
        %458 = vmatprep.subr.mxu0 0.0
        %459 = vmatpush1.msra.mxu0 0.0
        %460 = vmatprep.subr.mxu0 0.0
        %461 = vmatpush1.msra.mxu0 0.0
        %462 = vmatprep.subr.mxu0 0.0
        %463 = vmatpush1.msra.mxu0 0.0
        %464 = vmatprep.subr.mxu0 0.0
        %465 = vmatpush1.msra.mxu0 0.0
        %466 = vmatprep.subr.mxu0 0.0
        %467 = vmatpush1.msra.mxu0 0.0
        %468 = vmatprep.subr.mxu0 0.0
        %469 = vmatpush1.msra.mxu0 0.0
        %470 = vmatprep.subr.mxu0 0.0
        %471 = vmatpush1.msra.mxu0 %v323
        %472 = vmatprep.subr.mxu0 0.0
        %473 = vmatpush2.msra.mxu0 0.0
        %474 = vmatprep.subr.mxu0 0.0
        %475 = vmatpush2.msra.mxu0 0.0
        %476 = vmatprep.subr.mxu0 0.0
        %477 = vmatpush2.msra.mxu0 0.0
        %478 = vmatprep.subr.mxu0 0.0
        %479 = vmatpush2.msra.mxu0 0.0
        %480 = vmatprep.subr.mxu0 0.0
        %481 = vmatpush2.msra.mxu0 0.0
        %482 = vmatprep.subr.mxu0 0.0
        %483 = vmatpush2.msra.mxu0 0.0
        %484 = vmatprep.subr.mxu0 0.0
        %485 = vmatpush2.msra.mxu0 0.0
        %486 = vmatprep.subr.mxu0 0.0
        %487 = vmatpush2.msra.mxu0 0.0
        %488 = vmatprep.subr.mxu0 0.0
        %489 = vmatpush2.msra.mxu0 0.0
        %490 = vmatprep.subr.mxu0 0.0
        %491 = vmatpush2.msra.mxu0 0.0
        %492 = vmatprep.subr.mxu0 0.0
        %493 = vmatpush2.msra.mxu0 0.0
        %494 = vmatprep.subr.mxu0 0.0
        %495 = vmatpush2.msra.mxu0 0.0
        %496 = vmatprep.subr.mxu0 0.0
        %497 = vmatpush2.msra.mxu0 0.0
        %498 = vmatprep.subr.mxu0 0.0
        %499 = vmatpush2.msra.mxu0 0.0
        %500 = vmatprep.subr.mxu0 0.0
        %501 = vmatpush2.msra.mxu0 0.0
        %502 = vmatprep.subr.mxu0 0.0
        %503 = vmatpush2.msra.mxu0 0.0
        %504 = vmatprep.mubr.f32.mxu0 0.0
        %505 = vmatmul.mubr.f32.gmra.mxu0 %v438
        %v506 = vpop.f32.mrf.mxu0
        %v507 = vadd.f32 0.0, %v506
        %v508 = vpop.f32.mrf.mxu0
        %509 = vdwg.mxu0
        %v510 = vmul.f32 %v507, %v436
        %511 = vst.msk [vmem:[%s288] sm:$0xff] %vm332, %v510
        %s512 = sand.u32 %s161, 1
        %s513 = scalar_lea.sflag [#allocation3], %s512
        %s514 = sand.u32 %s161, 1
        %s515 = smul.addr %s514, 8
        %s516 = scalar_lea.vmem [#allocation2], %s515
        // Predicated region
        $region37: #{tpu_custom_call.1} parent=35 // pred_check
          %p517 = pneg %p171
        $region38: #{tpu_custom_call.1} parent=35 // pred_check_branch
          %519 = sbr.rel (%p517) target = $region40
        $region39: #{tpu_custom_call.1} parent=35 // pred_region
          %s521 = ssub.s32 128, 128
          %522 = vsyncadd %s513, %s521
          %s523 = sadd.s32 %s25, %s24
          %s524 = smul.addr %s23, 4
          %s525 = sadd.s32 %s523, %s524
          %s526 = smul.addr %s525, 128
          %s527 = scalar_lea.hbm %s4, %s526
          %s529 = sshll.u32 %s516, 4
          %s530 = int_to_ptr.vmem [resolvable:$true] %s529
          %532 = dma.vmem_to_hbm [thread:$0]  %s530, 128, %s527, %s513
        $region40: #{tpu_custom_call.1} parent=35 // pred_fallthru
          _
      $region36: #{tpu_custom_call.1} parent=5 // pred_fallthru
        _
      %p533 = scmp.le.s32.totalorder 2, %s13
      // Predicated region
      $region41: #{tpu_custom_call.1} parent=5 // pred_check
        %p534 = pneg %p533
      $region42: #{tpu_custom_call.1} parent=5 // pred_check_branch
        %536 = sbr.rel (%p534) target = $region44
      $region43: #{tpu_custom_call.1} parent=5 // pred_region
        %s537 = ssub.s32 %s13, 2
        // Predicated region
        $region45: #{tpu_custom_call.1} parent=43 // pred_check
          %p538 = pneg %p177
        $region46: #{tpu_custom_call.1} parent=43 // pred_check_branch
          %540 = sbr.rel (%p538) target = $region48
        $region47: #{tpu_custom_call.1} parent=43 // pred_region
          %s541 = sand.u32 %s162, 1
          %s542 = scalar_lea.sflag [#allocation3], %s541
          %s543 = sand.u32 %s162, 1
          %s544 = smul.addr %s543, 8
          %s545 = scalar_lea.vmem [#allocation2], %s544
          %546 = dma.done %s542, 128
        $region48: #{tpu_custom_call.1} parent=43 // pred_fallthru
          _
      $region44: #{tpu_custom_call.1} parent=5 // pred_fallthru
        _
    $region6: #{tpu_custom_call.1} parent=1 // loop_footer
      %s17 = sadd.s32 1, %s13
    $region7: #{tpu_custom_call.1} parent=1 // loop_footer_branch
      %12 = sbr.rel target = $region3
    $region8: #{tpu_custom_call.1} parent=1 // loop_exit
      _
    %547 = vsyncpa [#allocation3], 1
    %s548 = scalar_lea.sflag [#allocation3], 1
    %549 = vsyncpa %s548, 1

</llo_original>
